<compile_context>
chip_gen: v5e
topology: v5e:2x2
jax: 0.10.0
libtpu: 0.0.40
codegen_flags: <defaults>
</compile_context>

<pallas_src>
import functools

import numpy as np
import jax
import jax.numpy as jnp
from jax.experimental import pallas as pl
from jax.experimental.pallas import tpu as pltpu


# ---------------- fused per-graph Pallas kernel ----------------

def _mpgnn_graph_kernel(nf_ref, ef_ref, s_ref, a_ref, p_ref, q_ref, r_ref,
                        wp_ref, bp_ref, we1_ref, be1_ref, we2_ref, be2_ref,
                        bconv_ref, wout_ref, bout_ref, o_ref, *, num_steps, F):
    f32 = jnp.float32
    bf16 = jnp.bfloat16

    nf = nf_ref[0]          # (Vm, node_in)  f32   (pad rows are zero)
    ef = ef_ref[0]          # (Em, edge_in)  f32
    S = s_ref[0]            # (Em, Vm)       bf16  one-hot src gather (exact 0/1)
    A = a_ref[0]            # (Vm, Em)       bf16  one-hot dst scatter-add
    p = p_ref[0]            # (1, Vm)        f32   mean-pool row (0 on pad nodes)
    Q = q_ref[...]          # (F, F*F)       bf16  (xs @ Q)[e, k*F+o] = xs[e, k]
    R = r_ref[...]          # (F*F, F)       bf16  (prod @ R)[e, o]  = sum_k prod[e, k*F+o]

    # --- project_node_feats + ReLU --------------------------------- (Vm, F)
    x = jnp.dot(nf, wp_ref[...], preferred_element_type=f32) + bp_ref[...]
    x = jnp.maximum(x, 0.0)

    # --- edge network (Linear -> ReLU -> Linear), computed once ---- (Em, F*F)
    h = jnp.dot(ef, we1_ref[...], preferred_element_type=f32) + be1_ref[...]
    h = jnp.maximum(h, 0.0)
    w_edge = jnp.dot(h, we2_ref[...], preferred_element_type=f32) + be2_ref[...]

    Vm = A.shape[0]
    b_conv = jnp.broadcast_to(bconv_ref[...], (Vm, F))   # hoisted broadcast

    # --- num_steps x (NNConv(sum) + ReLU); x loop-carried in f32 ----
    # All structural dots use bf16 operands (fast MXU path) with f32 accumulation.
    def step(_, x):
        xs = jnp.dot(S, x.astype(bf16), preferred_element_type=f32)              # (Em, F)  gather
        prod = jnp.dot(xs.astype(bf16), Q, preferred_element_type=f32) * w_edge  # (Em, F*F) lane-dense
        msg = jnp.dot(prod.astype(bf16), R, preferred_element_type=f32)          # (Em, F)  per-edge matvec
        agg = jnp.dot(A, msg.astype(bf16), preferred_element_type=f32)           # (Vm, F)  scatter-add
        return jnp.maximum(agg + b_conv, 0.0)

    # unroll=True is only appropriate while num_steps is small; switch to
    # unroll=False (or pl.loop) if num_steps / E grow (vreg pressure).
    x = jax.lax.fori_loop(0, num_steps, step, x, unroll=True)

    # --- readout: per-graph mean pooling (pad nodes weighted 0) + linear ---
    g = jnp.dot(p, x, preferred_element_type=f32)                                # (1, F)
    o_ref[0] = jnp.dot(g, wout_ref[...], preferred_element_type=f32) + bout_ref[...]


# ---------------- wrapper (glue) ----------------

def mpgnn_forward(params, node_feats_p, edge_feats_p, S_p, A_p, P_p, num_steps, F):
    """Inputs are padded per-graph dense structures:
       node_feats_p (G, Vm, node_in), edge_feats_p (G, Em, edge_in),
       S_p (G, Em, Vm), A_p (G, Vm, Em), P_p (G, 1, Vm)."""
    G, Vm, _ = node_feats_p.shape
    Em = edge_feats_p.shape[1]
    n_classes = params["Wout"].shape[1]

    # Constant expand / reduce matrices for the per-edge mat-vec (exact 0/1 -> bf16).
    j = np.arange(F * F)
    Qm = np.zeros((F, F * F), np.float32); Qm[j // F, j] = 1.0
    Rm = np.zeros((F * F, F), np.float32); Rm[j, j % F] = 1.0

    kernel = functools.partial(_mpgnn_graph_kernel, num_steps=num_steps, F=F)

    def per_graph(a):   # one graph's block per grid step
        return pl.BlockSpec((1,) + a.shape[1:], lambda g: (g,) + (0,) * (a.ndim - 1))

    def resident(a):    # whole array, same block every step -> DMA'd once, stays in VMEM
        return pl.BlockSpec(a.shape, lambda g: (0,) * a.ndim)

    args = (
        jnp.asarray(node_feats_p, jnp.float32),
        jnp.asarray(edge_feats_p, jnp.float32),
        jnp.asarray(S_p, jnp.bfloat16),        # one-hot 0/1: exact in bf16
        jnp.asarray(A_p, jnp.bfloat16),
        jnp.asarray(P_p, jnp.float32),         # 1/|V_g| entries: keep f32
        jnp.asarray(Qm, jnp.bfloat16),
        jnp.asarray(Rm, jnp.bfloat16),
        params["Wp"], params["bp"],
        params["We1"], params["be1"],
        params["We2"], params["be2"],
        params["b_conv"],
        params["Wout"], params["bout"],
    )
    in_specs = [per_graph(a) for a in args[:5]] + [resident(a) for a in args[5:]]

    # Scoped-VMEM limit sized from the actual footprint (v5e default is 16 MiB).
    per_graph_bytes = sum(int(np.prod(a.shape[1:])) * a.dtype.itemsize for a in args[:5])
    resident_bytes = sum(a.size * a.dtype.itemsize for a in args[5:])
    interm_bytes = Em * F * F * 4 * 2 + Vm * F * 4 * 4       # w_edge/prod + x/xs/msg/agg
    footprint = 2 * per_graph_bytes + resident_bytes + interm_bytes  # 2x: double-buffered blocks
    vmem_limit = int(min(max(4 * footprint, 32 * 2**20), 48 * 2**20))

    out = pl.pallas_call(
        kernel,
        grid=(G,),
        out_shape=jax.ShapeDtypeStruct((G, 1, n_classes), jnp.float32),
        in_specs=in_specs,
        out_specs=pl.BlockSpec((1, 1, n_classes), lambda g: (g, 0, 0)),
        compiler_params=pltpu.CompilerParams(
            dimension_semantics=("parallel",),   # graphs are independent -> megacore on v7x
            vmem_limit_bytes=vmem_limit),
    )(*args)
    return out.reshape(G, n_classes)


# ---------------- pure-JAX reference (for correctness check) ----------------

def mpgnn_reference(params, node_feats, edge_feats, src, dst, graph_ids, num_steps, F, G):
    x = jax.nn.relu(node_feats @ params["Wp"] + params["bp"])
    h = jax.nn.relu(edge_feats @ params["We1"] + params["be1"])
    w = (h @ params["We2"] + params["be2"]).reshape(-1, F, F)
    for _ in range(num_steps):
        xs = x[src]                                            # (E, F)
        msg = jnp.einsum("ek,eko->eo", xs, w)                  # per-edge mat-vec
        agg = jnp.zeros_like(x).at[dst].add(msg)               # sum aggregation
        x = jax.nn.relu(agg + params["b_conv"])
    counts = jnp.zeros((G,), jnp.float32).at[graph_ids].add(1.0)
    sums = jnp.zeros((G, F), jnp.float32).at[graph_ids].add(x)
    gfeat = sums / counts[:, None]
    return gfeat @ params["Wout"] + params["bout"]


if __name__ == "__main__":
    # Module hyper-params (defaults from __init__, plus small required in-feats)
    node_in, edge_in = 8, 12
    F = 16            # node_out_feats
    H = 32            # edge_hidden_feats
    num_steps = 2     # num_step_message_passing
    n_classes = 2

    # Synthetic batched graph: 2 graphs (8 and 5 nodes), each a 2-neighbor ring.
    nodes_per_graph = [8, 5]
    G = len(nodes_per_graph)
    src_list, dst_list, gid = [], [], []
    off = 0
    for g, n in enumerate(nodes_per_graph):
        gid += [g] * n
        for i in range(n):
            src_list += [off + i, off + i]
            dst_list += [off + (i + 1) % n, off + (i + 2) % n]
        off += n
    V = sum(nodes_per_graph)
    E = len(src_list)
    src_np = np.array(src_list, np.int32)
    dst_np = np.array(dst_list, np.int32)
    gid_np = np.array(gid, np.int32)

    # Deterministic parameter init
    key = jax.random.PRNGKey(0)
    ks = jax.random.split(key, 12)

    def init(k, shape, scale=0.1):
        return (scale * jax.random.normal(k, shape)).astype(jnp.float32)

    params = {
        "Wp": init(ks[0], (node_in, F)), "bp": init(ks[1], (1, F)),
        "We1": init(ks[2], (edge_in, H)), "be1": init(ks[3], (1, H)),
        "We2": init(ks[4], (H, F * F)), "be2": init(ks[5], (1, F * F)),
        "b_conv": init(ks[6], (1, F)),            # NNConv bias
        "Wout": init(ks[7], (F, n_classes)), "bout": init(ks[8], (1, n_classes)),
    }

    node_feats = init(ks[9], (V, node_in), 1.0)
    edge_feats = init(ks[10], (E, edge_in), 1.0)

    # --- build padded per-graph dense structures (glue, built once per batch) ---
    def rup(x, m): return ((x + m - 1) // m) * m
    Vmax = rup(max(nodes_per_graph), 8)
    Emax = rup(max(2 * n for n in nodes_per_graph), 8)

    NF = np.zeros((G, Vmax, node_in), np.float32)
    EF = np.zeros((G, Emax, edge_in), np.float32)
    S_p = np.zeros((G, Emax, Vmax), np.float32)
    A_p = np.zeros((G, Vmax, Emax), np.float32)
    P_p = np.zeros((G, 1, Vmax), np.float32)
    nf_np, ef_np = np.asarray(node_feats), np.asarray(edge_feats)
    n_off = e_off = 0
    for g, n in enumerate(nodes_per_graph):
        e = 2 * n
        NF[g, :n] = nf_np[n_off:n_off + n]
        EF[g, :e] = ef_np[e_off:e_off + e]
        loc_src = src_np[e_off:e_off + e] - n_off
        loc_dst = dst_np[e_off:e_off + e] - n_off
        S_p[g, np.arange(e), loc_src] = 1.0
        A_p[g, loc_dst, np.arange(e)] = 1.0
        P_p[g, 0, :n] = 1.0 / n
        n_off += n
        e_off += e

    out = mpgnn_forward(params, NF, EF, S_p, A_p, P_p, num_steps, F)
    out = jax.block_until_ready(out)

    ref = mpgnn_reference(params, node_feats, edge_feats,
                          jnp.asarray(src_np), jnp.asarray(dst_np), jnp.asarray(gid_np),
                          num_steps, F, G)
    assert out.shape == (G, n_classes)
    # bf16 operands on the structural matmuls (with f32 accumulation) bound the
    # deviation from the pure-f32 reference to ~1e-3; tolerance reflects that.
    assert jnp.allclose(out, ref, atol=5e-3, rtol=1e-2), (out, ref)
    print("KERNEL_OK")
</pallas_src>

<mosaic_0001>
module attributes {stable_mosaic.version = 11 : i64} {
  func.func @_mpgnn_graph_kernel(%arg0: i32, %arg1: memref<1x8x8xf32, #tpu.memory_space<vmem>>, %arg2: memref<1x16x12xf32, #tpu.memory_space<vmem>>, %arg3: memref<1x16x8xbf16, #tpu.memory_space<vmem>>, %arg4: memref<1x8x16xbf16, #tpu.memory_space<vmem>>, %arg5: memref<1x1x8xf32, #tpu.memory_space<vmem>>, %arg6: memref<16x256xbf16, #tpu.memory_space<vmem>>, %arg7: memref<256x16xbf16, #tpu.memory_space<vmem>>, %arg8: memref<8x16xf32, #tpu.memory_space<vmem>>, %arg9: memref<1x16xf32, #tpu.memory_space<vmem>>, %arg10: memref<12x32xf32, #tpu.memory_space<vmem>>, %arg11: memref<1x32xf32, #tpu.memory_space<vmem>>, %arg12: memref<32x256xf32, #tpu.memory_space<vmem>>, %arg13: memref<1x256xf32, #tpu.memory_space<vmem>>, %arg14: memref<1x16xf32, #tpu.memory_space<vmem>>, %arg15: memref<16x2xf32, #tpu.memory_space<vmem>>, %arg16: memref<1x2xf32, #tpu.memory_space<vmem>>, %arg17: memref<1x1x2xf32, #tpu.memory_space<vmem>>) attributes {dimension_semantics = [#tpu.dimension_semantics<parallel>], iteration_bounds = array<i64: 2>, scalar_prefetch = 0 : i64, scratch_operands = 0 : i64, tpu.core_type = #tpu.core_type<tc>, window_params = [{transform_indices = @transform_0, window_bounds = array<i64: 1, 8, 8>}, {transform_indices = @transform_1, window_bounds = array<i64: 1, 16, 12>}, {transform_indices = @transform_2, window_bounds = array<i64: 1, 16, 8>}, {transform_indices = @transform_3, window_bounds = array<i64: 1, 8, 16>}, {transform_indices = @transform_4, window_bounds = array<i64: 1, 1, 8>}, {pipeline_mode = #tpu.pipeline_mode<synchronous>, transform_indices = @transform_5, window_bounds = array<i64: 16, 256>}, {pipeline_mode = #tpu.pipeline_mode<synchronous>, transform_indices = @transform_6, window_bounds = array<i64: 256, 16>}, {pipeline_mode = #tpu.pipeline_mode<synchronous>, transform_indices = @transform_7, window_bounds = array<i64: 8, 16>}, {pipeline_mode = #tpu.pipeline_mode<synchronous>, transform_indices = @transform_8, window_bounds = array<i64: 1, 16>}, {pipeline_mode = #tpu.pipeline_mode<synchronous>, transform_indices = @transform_9, window_bounds = array<i64: 12, 32>}, {pipeline_mode = #tpu.pipeline_mode<synchronous>, transform_indices = @transform_10, window_bounds = array<i64: 1, 32>}, {pipeline_mode = #tpu.pipeline_mode<synchronous>, transform_indices = @transform_11, window_bounds = array<i64: 32, 256>}, {pipeline_mode = #tpu.pipeline_mode<synchronous>, transform_indices = @transform_12, window_bounds = array<i64: 1, 256>}, {pipeline_mode = #tpu.pipeline_mode<synchronous>, transform_indices = @transform_13, window_bounds = array<i64: 1, 16>}, {pipeline_mode = #tpu.pipeline_mode<synchronous>, transform_indices = @transform_14, window_bounds = array<i64: 16, 2>}, {pipeline_mode = #tpu.pipeline_mode<synchronous>, transform_indices = @transform_15, window_bounds = array<i64: 1, 2>}, {transform_indices = @transform_16, window_bounds = array<i64: 1, 1, 2>}]} {
    %c0 = arith.constant 0 : index
    %c0_0 = arith.constant 0 : index
    %c0_1 = arith.constant 0 : index
    %0 = vector.load %arg1[%c0, %c0_0, %c0_1] : memref<1x8x8xf32, #tpu.memory_space<vmem>>, vector<1x8x8xf32>
    %1 = vector.shape_cast %0 : vector<1x8x8xf32> to vector<8x8xf32>
    %c0_2 = arith.constant 0 : index
    %c0_3 = arith.constant 0 : index
    %c0_4 = arith.constant 0 : index
    %2 = vector.load %arg2[%c0_2, %c0_3, %c0_4] : memref<1x16x12xf32, #tpu.memory_space<vmem>>, vector<1x16x12xf32>
    %3 = vector.shape_cast %2 : vector<1x16x12xf32> to vector<16x12xf32>
    %c0_5 = arith.constant 0 : index
    %c0_6 = arith.constant 0 : index
    %c0_7 = arith.constant 0 : index
    %4 = vector.load %arg3[%c0_5, %c0_6, %c0_7] : memref<1x16x8xbf16, #tpu.memory_space<vmem>>, vector<1x16x8xbf16>
    %5 = vector.shape_cast %4 : vector<1x16x8xbf16> to vector<16x8xbf16>
    %c0_8 = arith.constant 0 : index
    %c0_9 = arith.constant 0 : index
    %c0_10 = arith.constant 0 : index
    %6 = vector.load %arg4[%c0_8, %c0_9, %c0_10] : memref<1x8x16xbf16, #tpu.memory_space<vmem>>, vector<1x8x16xbf16>
    %7 = vector.shape_cast %6 : vector<1x8x16xbf16> to vector<8x16xbf16>
    %c0_11 = arith.constant 0 : index
    %c0_12 = arith.constant 0 : index
    %c0_13 = arith.constant 0 : index
    %8 = vector.load %arg5[%c0_11, %c0_12, %c0_13] : memref<1x1x8xf32, #tpu.memory_space<vmem>>, vector<1x1x8xf32>
    %9 = vector.shape_cast %8 : vector<1x1x8xf32> to vector<1x8xf32>
    %c0_14 = arith.constant 0 : index
    %c0_15 = arith.constant 0 : index
    %10 = vector.load %arg6[%c0_14, %c0_15] : memref<16x256xbf16, #tpu.memory_space<vmem>>, vector<16x256xbf16>
    %c0_16 = arith.constant 0 : index
    %c0_17 = arith.constant 0 : index
    %11 = vector.load %arg7[%c0_16, %c0_17] : memref<256x16xbf16, #tpu.memory_space<vmem>>, vector<256x16xbf16>
    %c0_18 = arith.constant 0 : index
    %c0_19 = arith.constant 0 : index
    %12 = vector.load %arg8[%c0_18, %c0_19] : memref<8x16xf32, #tpu.memory_space<vmem>>, vector<8x16xf32>
    %cst = arith.constant dense<0.000000e+00> : vector<8x16xf32>
    %13 = tpu.matmul %1, %12, %cst {dimension_numbers = #tpu.dot_dimension_numbers<[1], [0], [0], [1], [0, 0, 1, 1], [], []>} : vector<8x8xf32>, vector<8x16xf32>, vector<8x16xf32> -> vector<8x16xf32>
    %c0_20 = arith.constant 0 : index
    %c0_21 = arith.constant 0 : index
    %14 = vector.load %arg9[%c0_20, %c0_21] : memref<1x16xf32, #tpu.memory_space<vmem>>, vector<1x16xf32>
    %15 = vector.broadcast %14 : vector<1x16xf32> to vector<8x16xf32>
    %16 = arith.addf %13, %15 : vector<8x16xf32>
    %cst_22 = arith.constant 0.000000e+00 : f32
    %17 = vector.broadcast %cst_22 : f32 to vector<8x16xf32>
    %18 = arith.maximumf %16, %17 : vector<8x16xf32>
    %c0_23 = arith.constant 0 : index
    %c0_24 = arith.constant 0 : index
    %19 = vector.load %arg10[%c0_23, %c0_24] : memref<12x32xf32, #tpu.memory_space<vmem>>, vector<12x32xf32>
    %cst_25 = arith.constant dense<0.000000e+00> : vector<16x32xf32>
    %20 = tpu.matmul %3, %19, %cst_25 {dimension_numbers = #tpu.dot_dimension_numbers<[1], [0], [0], [1], [0, 0, 1, 1], [], []>} : vector<16x12xf32>, vector<12x32xf32>, vector<16x32xf32> -> vector<16x32xf32>
    %c0_26 = arith.constant 0 : index
    %c0_27 = arith.constant 0 : index
    %21 = vector.load %arg11[%c0_26, %c0_27] : memref<1x32xf32, #tpu.memory_space<vmem>>, vector<1x32xf32>
    %22 = vector.broadcast %21 : vector<1x32xf32> to vector<16x32xf32>
    %23 = arith.addf %20, %22 : vector<16x32xf32>
    %cst_28 = arith.constant 0.000000e+00 : f32
    %24 = vector.broadcast %cst_28 : f32 to vector<16x32xf32>
    %25 = arith.maximumf %23, %24 : vector<16x32xf32>
    %c0_29 = arith.constant 0 : index
    %c0_30 = arith.constant 0 : index
    %26 = vector.load %arg12[%c0_29, %c0_30] : memref<32x256xf32, #tpu.memory_space<vmem>>, vector<32x256xf32>
    %cst_31 = arith.constant dense<0.000000e+00> : vector<16x256xf32>
    %27 = tpu.matmul %25, %26, %cst_31 {dimension_numbers = #tpu.dot_dimension_numbers<[1], [0], [0], [1], [0, 0, 1, 1], [], []>} : vector<16x32xf32>, vector<32x256xf32>, vector<16x256xf32> -> vector<16x256xf32>
    %c0_32 = arith.constant 0 : index
    %c0_33 = arith.constant 0 : index
    %28 = vector.load %arg13[%c0_32, %c0_33] : memref<1x256xf32, #tpu.memory_space<vmem>>, vector<1x256xf32>
    %29 = vector.broadcast %28 : vector<1x256xf32> to vector<16x256xf32>
    %30 = arith.addf %27, %29 : vector<16x256xf32>
    %c0_34 = arith.constant 0 : index
    %c0_35 = arith.constant 0 : index
    %31 = vector.load %arg14[%c0_34, %c0_35] : memref<1x16xf32, #tpu.memory_space<vmem>>, vector<1x16xf32>
    %32 = vector.shape_cast %31 : vector<1x16xf32> to vector<1x16xf32>
    %33 = vector.broadcast %32 : vector<1x16xf32> to vector<8x16xf32>
    %c0_i32 = arith.constant 0 : i32
    %34 = arith.truncf %18 : vector<8x16xf32> to vector<8x16xbf16>
    %cst_36 = arith.constant dense<0.000000e+00> : vector<16x16xf32>
    %35 = tpu.matmul %5, %34, %cst_36 {dimension_numbers = #tpu.dot_dimension_numbers<[1], [0], [0], [1], [0, 0, 1, 1], [], []>} : vector<16x8xbf16>, vector<8x16xbf16>, vector<16x16xf32> -> vector<16x16xf32>
    %36 = arith.truncf %35 : vector<16x16xf32> to vector<16x16xbf16>
    %cst_37 = arith.constant dense<0.000000e+00> : vector<16x256xf32>
    %37 = tpu.matmul %36, %10, %cst_37 {dimension_numbers = #tpu.dot_dimension_numbers<[1], [0], [0], [1], [0, 0, 1, 1], [], []>} : vector<16x16xbf16>, vector<16x256xbf16>, vector<16x256xf32> -> vector<16x256xf32>
    %38 = arith.mulf %37, %30 : vector<16x256xf32>
    %39 = arith.truncf %38 : vector<16x256xf32> to vector<16x256xbf16>
    %cst_38 = arith.constant dense<0.000000e+00> : vector<16x16xf32>
    %40 = tpu.matmul %39, %11, %cst_38 {dimension_numbers = #tpu.dot_dimension_numbers<[1], [0], [0], [1], [0, 0, 1, 1], [], []>} : vector<16x256xbf16>, vector<256x16xbf16>, vector<16x16xf32> -> vector<16x16xf32>
    %41 = arith.truncf %40 : vector<16x16xf32> to vector<16x16xbf16>
    %cst_39 = arith.constant dense<0.000000e+00> : vector<8x16xf32>
    %42 = tpu.matmul %7, %41, %cst_39 {dimension_numbers = #tpu.dot_dimension_numbers<[1], [0], [0], [1], [0, 0, 1, 1], [], []>} : vector<8x16xbf16>, vector<16x16xbf16>, vector<8x16xf32> -> vector<8x16xf32>
    %43 = arith.addf %42, %33 : vector<8x16xf32>
    %cst_40 = arith.constant 0.000000e+00 : f32
    %44 = vector.broadcast %cst_40 : f32 to vector<8x16xf32>
    %45 = arith.maximumf %43, %44 : vector<8x16xf32>
    %c1_i32 = arith.constant 1 : i32
    %46 = arith.truncf %45 : vector<8x16xf32> to vector<8x16xbf16>
    %cst_41 = arith.constant dense<0.000000e+00> : vector<16x16xf32>
    %47 = tpu.matmul %5, %46, %cst_41 {dimension_numbers = #tpu.dot_dimension_numbers<[1], [0], [0], [1], [0, 0, 1, 1], [], []>} : vector<16x8xbf16>, vector<8x16xbf16>, vector<16x16xf32> -> vector<16x16xf32>
    %48 = arith.truncf %47 : vector<16x16xf32> to vector<16x16xbf16>
    %cst_42 = arith.constant dense<0.000000e+00> : vector<16x256xf32>
    %49 = tpu.matmul %48, %10, %cst_42 {dimension_numbers = #tpu.dot_dimension_numbers<[1], [0], [0], [1], [0, 0, 1, 1], [], []>} : vector<16x16xbf16>, vector<16x256xbf16>, vector<16x256xf32> -> vector<16x256xf32>
    %50 = arith.mulf %49, %30 : vector<16x256xf32>
    %51 = arith.truncf %50 : vector<16x256xf32> to vector<16x256xbf16>
    %cst_43 = arith.constant dense<0.000000e+00> : vector<16x16xf32>
    %52 = tpu.matmul %51, %11, %cst_43 {dimension_numbers = #tpu.dot_dimension_numbers<[1], [0], [0], [1], [0, 0, 1, 1], [], []>} : vector<16x256xbf16>, vector<256x16xbf16>, vector<16x16xf32> -> vector<16x16xf32>
    %53 = arith.truncf %52 : vector<16x16xf32> to vector<16x16xbf16>
    %cst_44 = arith.constant dense<0.000000e+00> : vector<8x16xf32>
    %54 = tpu.matmul %7, %53, %cst_44 {dimension_numbers = #tpu.dot_dimension_numbers<[1], [0], [0], [1], [0, 0, 1, 1], [], []>} : vector<8x16xbf16>, vector<16x16xbf16>, vector<8x16xf32> -> vector<8x16xf32>
    %55 = arith.addf %54, %33 : vector<8x16xf32>
    %cst_45 = arith.constant 0.000000e+00 : f32
    %56 = vector.broadcast %cst_45 : f32 to vector<8x16xf32>
    %57 = arith.maximumf %55, %56 : vector<8x16xf32>
    %cst_46 = arith.constant dense<0.000000e+00> : vector<1x16xf32>
    %58 = tpu.matmul %9, %57, %cst_46 {dimension_numbers = #tpu.dot_dimension_numbers<[1], [0], [0], [1], [0, 0, 1, 1], [], []>} : vector<1x8xf32>, vector<8x16xf32>, vector<1x16xf32> -> vector<1x16xf32>
    %c0_47 = arith.constant 0 : index
    %c0_48 = arith.constant 0 : index
    %59 = vector.load %arg15[%c0_47, %c0_48] : memref<16x2xf32, #tpu.memory_space<vmem>>, vector<16x2xf32>
    %cst_49 = arith.constant dense<0.000000e+00> : vector<1x2xf32>
    %60 = tpu.matmul %58, %59, %cst_49 {dimension_numbers = #tpu.dot_dimension_numbers<[1], [0], [0], [1], [0, 0, 1, 1], [], []>} : vector<1x16xf32>, vector<16x2xf32>, vector<1x2xf32> -> vector<1x2xf32>
    %c0_50 = arith.constant 0 : index
    %c0_51 = arith.constant 0 : index
    %61 = vector.load %arg16[%c0_50, %c0_51] : memref<1x2xf32, #tpu.memory_space<vmem>>, vector<1x2xf32>
    %62 = arith.addf %60, %61 : vector<1x2xf32>
    %c0_52 = arith.constant 0 : index
    %c0_53 = arith.constant 0 : index
    %c0_54 = arith.constant 0 : index
    %63 = vector.load %arg17[%c0_52, %c0_53, %c0_54] : memref<1x1x2xf32, #tpu.memory_space<vmem>>, vector<1x1x2xf32>
    %64 = vector.shape_cast %63 : vector<1x1x2xf32> to vector<1x2xf32>
    %65 = vector.shape_cast %62 : vector<1x2xf32> to vector<1x1x2xf32>
    tpu.vector_store %arg17[%c0_52, %c0_53, %c0_54], %65 {strides = array<i32>} : memref<1x1x2xf32, #tpu.memory_space<vmem>>, vector<1x1x2xf32>,
    return
  }
  func.func @transform_0(%arg0: i32) -> (i32, i32, i32) {
    %c0_i32 = arith.constant 0 : i32
    %c0_i32_0 = arith.constant 0 : i32
    %c0_i32_1 = arith.constant 0 : i32
    return %arg0, %c0_i32, %c0_i32_0 : i32, i32, i32
  }
  func.func @transform_1(%arg0: i32) -> (i32, i32, i32) {
    %c0_i32 = arith.constant 0 : i32
    %c0_i32_0 = arith.constant 0 : i32
    %c0_i32_1 = arith.constant 0 : i32
    return %arg0, %c0_i32, %c0_i32_0 : i32, i32, i32
  }
  func.func @transform_2(%arg0: i32) -> (i32, i32, i32) {
    %c0_i32 = arith.constant 0 : i32
    %c0_i32_0 = arith.constant 0 : i32
    %c0_i32_1 = arith.constant 0 : i32
    return %arg0, %c0_i32, %c0_i32_0 : i32, i32, i32
  }
  func.func @transform_3(%arg0: i32) -> (i32, i32, i32) {
    %c0_i32 = arith.constant 0 : i32
    %c0_i32_0 = arith.constant 0 : i32
    %c0_i32_1 = arith.constant 0 : i32
    return %arg0, %c0_i32, %c0_i32_0 : i32, i32, i32
  }
  func.func @transform_4(%arg0: i32) -> (i32, i32, i32) {
    %c0_i32 = arith.constant 0 : i32
    %c0_i32_0 = arith.constant 0 : i32
    %c0_i32_1 = arith.constant 0 : i32
    return %arg0, %c0_i32, %c0_i32_0 : i32, i32, i32
  }
  func.func @transform_5(%arg0: i32) -> (i32, i32) {
    %c0_i32 = arith.constant 0 : i32
    %c0_i32_0 = arith.constant 0 : i32
    %c0_i32_1 = arith.constant 0 : i32
    return %c0_i32, %c0_i32_0 : i32, i32
  }
  func.func @transform_6(%arg0: i32) -> (i32, i32) {
    %c0_i32 = arith.constant 0 : i32
    %c0_i32_0 = arith.constant 0 : i32
    %c0_i32_1 = arith.constant 0 : i32
    return %c0_i32, %c0_i32_0 : i32, i32
  }
  func.func @transform_7(%arg0: i32) -> (i32, i32) {
    %c0_i32 = arith.constant 0 : i32
    %c0_i32_0 = arith.constant 0 : i32
    %c0_i32_1 = arith.constant 0 : i32
    return %c0_i32, %c0_i32_0 : i32, i32
  }
  func.func @transform_8(%arg0: i32) -> (i32, i32) {
    %c0_i32 = arith.constant 0 : i32
    %c0_i32_0 = arith.constant 0 : i32
    %c0_i32_1 = arith.constant 0 : i32
    return %c0_i32, %c0_i32_0 : i32, i32
  }
  func.func @transform_9(%arg0: i32) -> (i32, i32) {
    %c0_i32 = arith.constant 0 : i32
    %c0_i32_0 = arith.constant 0 : i32
    %c0_i32_1 = arith.constant 0 : i32
    return %c0_i32, %c0_i32_0 : i32, i32
  }
  func.func @transform_10(%arg0: i32) -> (i32, i32) {
    %c0_i32 = arith.constant 0 : i32
    %c0_i32_0 = arith.constant 0 : i32
    %c0_i32_1 = arith.constant 0 : i32
    return %c0_i32, %c0_i32_0 : i32, i32
  }
  func.func @transform_11(%arg0: i32) -> (i32, i32) {
    %c0_i32 = arith.constant 0 : i32
    %c0_i32_0 = arith.constant 0 : i32
    %c0_i32_1 = arith.constant 0 : i32
    return %c0_i32, %c0_i32_0 : i32, i32
  }
  func.func @transform_12(%arg0: i32) -> (i32, i32) {
    %c0_i32 = arith.constant 0 : i32
    %c0_i32_0 = arith.constant 0 : i32
    %c0_i32_1 = arith.constant 0 : i32
    return %c0_i32, %c0_i32_0 : i32, i32
  }
  func.func @transform_13(%arg0: i32) -> (i32, i32) {
    %c0_i32 = arith.constant 0 : i32
    %c0_i32_0 = arith.constant 0 : i32
    %c0_i32_1 = arith.constant 0 : i32
    return %c0_i32, %c0_i32_0 : i32, i32
  }
  func.func @transform_14(%arg0: i32) -> (i32, i32) {
    %c0_i32 = arith.constant 0 : i32
    %c0_i32_0 = arith.constant 0 : i32
    %c0_i32_1 = arith.constant 0 : i32
    return %c0_i32, %c0_i32_0 : i32, i32
  }
  func.func @transform_15(%arg0: i32) -> (i32, i32) {
    %c0_i32 = arith.constant 0 : i32
    %c0_i32_0 = arith.constant 0 : i32
    %c0_i32_1 = arith.constant 0 : i32
    return %c0_i32, %c0_i32_0 : i32, i32
  }
  func.func @transform_16(%arg0: i32) -> (i32, i32, i32) {
    %c0_i32 = arith.constant 0 : i32
    %c0_i32_0 = arith.constant 0 : i32
    %c0_i32_1 = arith.constant 0 : i32
    return %arg0, %c0_i32, %c0_i32_0 : i32, i32, i32
  }
}

</mosaic_0001>

<llo_original>
// kernel: tpu_custom_call.1
$region0: #{tpu_custom_call.1}
  #allocation0 [shape = 'u32[]', space=smem, size = 0x4, offset = 0x4, fixed_abs, tag = 'smem constant byte address 0x4 - core index']
  #allocation1 [shape = 'u32[72,128]{1,0:T(1,128)}', space=vmem, size = 0x9000, scoped, tag = 'internal scratch']
  %s0 = inlined_call_operand.vmem [shape: f32[2,8,8], index: 0, kind: input, shape index: {}]
  %s1 = inlined_call_operand.vmem [shape: f32[2,16,12], index: 1, kind: input, shape index: {}]
  %s2 = inlined_call_operand.vmem [shape: bf16[2,16,8], index: 2, kind: input, shape index: {}]
  %s3 = inlined_call_operand.vmem [shape: bf16[2,8,16], index: 3, kind: input, shape index: {}]
  %s4 = inlined_call_operand.vmem [shape: f32[2,1,8], index: 4, kind: input, shape index: {}]
  %s5 = inlined_call_operand.vmem [shape: bf16[16,256], index: 5, kind: input, shape index: {}]
  %s6 = inlined_call_operand.vmem [shape: bf16[256,16], index: 6, kind: input, shape index: {}]
  %s7 = inlined_call_operand.vmem [shape: f32[8,16], index: 7, kind: input, shape index: {}]
  %s8 = inlined_call_operand.vmem [shape: f32[1,16], index: 8, kind: input, shape index: {}]
  %s9 = inlined_call_operand.vmem [shape: f32[12,32], index: 9, kind: input, shape index: {}]
  %s10 = inlined_call_operand.vmem [shape: f32[1,32], index: 10, kind: input, shape index: {}]
  %s11 = inlined_call_operand.vmem [shape: f32[32,256], index: 11, kind: input, shape index: {}]
  %s12 = inlined_call_operand.vmem [shape: f32[1,256], index: 12, kind: input, shape index: {}]
  %s13 = inlined_call_operand.vmem [shape: f32[1,16], index: 13, kind: input, shape index: {}]
  %s14 = inlined_call_operand.vmem [shape: f32[16,2], index: 14, kind: input, shape index: {}]
  %s15 = inlined_call_operand.vmem [shape: f32[1,2], index: 15, kind: input, shape index: {}]
  %s16 = inlined_call_operand.hbm [shape: f32[2,1,2], index: 16, kind: output, shape index: {}]
  %s17 = sld [smem:[#allocation0]]
  $region97: #{tpu_custom_call.1} parent=0
    _
  %s19 = ssub.s32 1, %s17
  %s20 = scalar_select 0, %s19, %s17
  $region1: #{tpu_custom_call.1} parent=0
    #allocation2 [shape = 'u8[1024]{0}', space=vmem, size = 0x400, scoped, tag = 'output window, operand 0']
    #allocation3 [shape = 's32[2]{0}', space=sflag, size = 0x8, scoped, tag = 'scoped memory for tpu_custom_call.1']
    %21 = vsyncpa [#allocation3], 0
    %s22 = scalar_lea.sflag [#allocation3], 1
    %23 = vsyncpa %s22, 0
    loop: start=0, step=1, limit=4
    $region2: #{tpu_custom_call.1} parent=1 // loop_pre_header
      _
    $region3: #{tpu_custom_call.1} parent=1 // loop_header
      %s25 = sphi 0, %s29
      %p26 = scmp.ge.s32.totalorder %s25, 4
      %s35 = sphi 0, %s37
      %s38 = sphi 0, %s35
      %s39 = sphi 0, %s38
      %s55 = sphi 0, %s39
      %s61 = sphi 0, %s63
      %s64 = sphi 0, %s61
      %s65 = sphi 0, %s64
      %s81 = sphi 0, %s65
      %s87 = sphi 0, %s89
      %s90 = sphi 0, %s87
      %s91 = sphi 0, %s90
      %s107 = sphi 0, %s91
      %s113 = sphi 0, %s115
      %s116 = sphi 0, %s113
      %s117 = sphi 0, %s116
      %s133 = sphi 0, %s117
      %s139 = sphi 0, %s141
      %s142 = sphi 0, %s139
      %s143 = sphi 0, %s142
      %s159 = sphi 0, %s143
      %s163 = sphi 0, %s163
      %s165 = sphi 0, %s163
      %s166 = sphi 0, %s165
      %s180 = sphi 0, %s166
      %s184 = sphi 0, %s184
      %s186 = sphi 0, %s184
      %s187 = sphi 0, %s186
      %s201 = sphi 0, %s187
      %s205 = sphi 0, %s205
      %s207 = sphi 0, %s205
      %s208 = sphi 0, %s207
      %s222 = sphi 0, %s208
      %s226 = sphi 0, %s226
      %s228 = sphi 0, %s226
      %s229 = sphi 0, %s228
      %s243 = sphi 0, %s229
      %s247 = sphi 0, %s247
      %s249 = sphi 0, %s247
      %s250 = sphi 0, %s249
      %s264 = sphi 0, %s250
      %s268 = sphi 0, %s268
      %s270 = sphi 0, %s268
      %s271 = sphi 0, %s270
      %s285 = sphi 0, %s271
      %s289 = sphi 0, %s289
      %s291 = sphi 0, %s289
      %s292 = sphi 0, %s291
      %s306 = sphi 0, %s292
      %s310 = sphi 0, %s310
      %s312 = sphi 0, %s310
      %s313 = sphi 0, %s312
      %s327 = sphi 0, %s313
      %s331 = sphi 0, %s331
      %s333 = sphi 0, %s331
      %s334 = sphi 0, %s333
      %s348 = sphi 0, %s334
      %s352 = sphi 0, %s352
      %s354 = sphi 0, %s352
      %s355 = sphi 0, %s354
      %s369 = sphi 0, %s355
      %s373 = sphi 0, %s373
      %s375 = sphi 0, %s373
      %s376 = sphi 0, %s375
      %s390 = sphi 0, %s376
      %s396 = sphi 0, %s398
      %s399 = sphi 0, %s396
      %s400 = sphi 0, %s399
      %s416 = sphi 0, %s400
    $region4: #{tpu_custom_call.1} parent=1 // loop_header_branch
      %28 = sbr.rel (%p26) target = $region8
    $region5: #{tpu_custom_call.1} parent=1 // loop_body
      %s30 = ssub.s32 %s25, 1
      %s31 = ssub.s32 %s25, 2
      %s32 = sadd.s32 %s25, 1
      %s33 = ssub.s32 %s25, %s32
      %p34 = scmp.eq.s32.totalorder %s33, 0
      %s36 = sadd.s32 %s35, 1
      %s37 = scalar_select %p34, %s35, %s36
      %p40 = pneg %p34
      %p41 = scmp.eq.s32.totalorder %s25, 1
      %p42 = por %p40, %p41
      %p43 = scmp.ne.s32.totalorder %s35, %s38
      %p44 = scmp.eq.s32.totalorder %s25, 0
      %p45 = por %p43, %p44
      %p46 = scmp.ne.s32.totalorder %s35, %s38
      %p47 = scmp.eq.s32.totalorder %s30, 1
      %p48 = por %p46, %p47
      %p49 = scmp.ne.s32.totalorder %s38, %s39
      %p50 = scmp.eq.s32.totalorder %s30, 0
      %p51 = por %p49, %p50
      %p52 = scmp.ne.s32.totalorder %s38, %s39
      %p53 = scmp.eq.s32.totalorder %s31, 1
      %p54 = por %p52, %p53
      %p56 = scmp.ne.s32.totalorder %s39, %s55
      %p57 = scmp.eq.s32.totalorder %s31, 0
      %p58 = por %p56, %p57
      %s59 = ssub.s32 %s25, %s32
      %p60 = scmp.eq.s32.totalorder %s59, 0
      %s62 = sadd.s32 %s61, 1
      %s63 = scalar_select %p60, %s61, %s62
      %p66 = pneg %p60
      %p67 = scmp.eq.s32.totalorder %s25, 1
      %p68 = por %p66, %p67
      %p69 = scmp.ne.s32.totalorder %s61, %s64
      %p70 = scmp.eq.s32.totalorder %s25, 0
      %p71 = por %p69, %p70
      %p72 = scmp.ne.s32.totalorder %s61, %s64
      %p73 = scmp.eq.s32.totalorder %s30, 1
      %p74 = por %p72, %p73
      %p75 = scmp.ne.s32.totalorder %s64, %s65
      %p76 = scmp.eq.s32.totalorder %s30, 0
      %p77 = por %p75, %p76
      %p78 = scmp.ne.s32.totalorder %s64, %s65
      %p79 = scmp.eq.s32.totalorder %s31, 1
      %p80 = por %p78, %p79
      %p82 = scmp.ne.s32.totalorder %s65, %s81
      %p83 = scmp.eq.s32.totalorder %s31, 0
      %p84 = por %p82, %p83
      %s85 = ssub.s32 %s25, %s32
      %p86 = scmp.eq.s32.totalorder %s85, 0
      %s88 = sadd.s32 %s87, 1
      %s89 = scalar_select %p86, %s87, %s88
      %p92 = pneg %p86
      %p93 = scmp.eq.s32.totalorder %s25, 1
      %p94 = por %p92, %p93
      %p95 = scmp.ne.s32.totalorder %s87, %s90
      %p96 = scmp.eq.s32.totalorder %s25, 0
      %p97 = por %p95, %p96
      %p98 = scmp.ne.s32.totalorder %s87, %s90
      %p99 = scmp.eq.s32.totalorder %s30, 1
      %p100 = por %p98, %p99
      %p101 = scmp.ne.s32.totalorder %s90, %s91
      %p102 = scmp.eq.s32.totalorder %s30, 0
      %p103 = por %p101, %p102
      %p104 = scmp.ne.s32.totalorder %s90, %s91
      %p105 = scmp.eq.s32.totalorder %s31, 1
      %p106 = por %p104, %p105
      %p108 = scmp.ne.s32.totalorder %s91, %s107
      %p109 = scmp.eq.s32.totalorder %s31, 0
      %p110 = por %p108, %p109
      %s111 = ssub.s32 %s25, %s32
      %p112 = scmp.eq.s32.totalorder %s111, 0
      %s114 = sadd.s32 %s113, 1
      %s115 = scalar_select %p112, %s113, %s114
      %p118 = pneg %p112
      %p119 = scmp.eq.s32.totalorder %s25, 1
      %p120 = por %p118, %p119
      %p121 = scmp.ne.s32.totalorder %s113, %s116
      %p122 = scmp.eq.s32.totalorder %s25, 0
      %p123 = por %p121, %p122
      %p124 = scmp.ne.s32.totalorder %s113, %s116
      %p125 = scmp.eq.s32.totalorder %s30, 1
      %p126 = por %p124, %p125
      %p127 = scmp.ne.s32.totalorder %s116, %s117
      %p128 = scmp.eq.s32.totalorder %s30, 0
      %p129 = por %p127, %p128
      %p130 = scmp.ne.s32.totalorder %s116, %s117
      %p131 = scmp.eq.s32.totalorder %s31, 1
      %p132 = por %p130, %p131
      %p134 = scmp.ne.s32.totalorder %s117, %s133
      %p135 = scmp.eq.s32.totalorder %s31, 0
      %p136 = por %p134, %p135
      %s137 = ssub.s32 %s25, %s32
      %p138 = scmp.eq.s32.totalorder %s137, 0
      %s140 = sadd.s32 %s139, 1
      %s141 = scalar_select %p138, %s139, %s140
      %p144 = pneg %p138
      %p145 = scmp.eq.s32.totalorder %s25, 1
      %p146 = por %p144, %p145
      %p147 = scmp.ne.s32.totalorder %s139, %s142
      %p148 = scmp.eq.s32.totalorder %s25, 0
      %p149 = por %p147, %p148
      %p150 = scmp.ne.s32.totalorder %s139, %s142
      %p151 = scmp.eq.s32.totalorder %s30, 1
      %p152 = por %p150, %p151
      %p153 = scmp.ne.s32.totalorder %s142, %s143
      %p154 = scmp.eq.s32.totalorder %s30, 0
      %p155 = por %p153, %p154
      %p156 = scmp.ne.s32.totalorder %s142, %s143
      %p157 = scmp.eq.s32.totalorder %s31, 1
      %p158 = por %p156, %p157
      %p160 = scmp.ne.s32.totalorder %s143, %s159
      %p161 = scmp.eq.s32.totalorder %s31, 0
      %p162 = por %p160, %p161
      %s164 = sadd.s32 %s163, 1
      %p167 = scmp.eq.s32.totalorder %s25, 1
      %p168 = scmp.ne.s32.totalorder %s163, %s165
      %p169 = scmp.eq.s32.totalorder %s25, 0
      %p170 = por %p168, %p169
      %p171 = scmp.ne.s32.totalorder %s163, %s165
      %p172 = scmp.eq.s32.totalorder %s30, 1
      %p173 = por %p171, %p172
      %p174 = scmp.ne.s32.totalorder %s165, %s166
      %p175 = scmp.eq.s32.totalorder %s30, 0
      %p176 = por %p174, %p175
      %p177 = scmp.ne.s32.totalorder %s165, %s166
      %p178 = scmp.eq.s32.totalorder %s31, 1
      %p179 = por %p177, %p178
      %p181 = scmp.ne.s32.totalorder %s166, %s180
      %p182 = scmp.eq.s32.totalorder %s31, 0
      %p183 = por %p181, %p182
      %s185 = sadd.s32 %s184, 1
      %p188 = scmp.eq.s32.totalorder %s25, 1
      %p189 = scmp.ne.s32.totalorder %s184, %s186
      %p190 = scmp.eq.s32.totalorder %s25, 0
      %p191 = por %p189, %p190
      %p192 = scmp.ne.s32.totalorder %s184, %s186
      %p193 = scmp.eq.s32.totalorder %s30, 1
      %p194 = por %p192, %p193
      %p195 = scmp.ne.s32.totalorder %s186, %s187
      %p196 = scmp.eq.s32.totalorder %s30, 0
      %p197 = por %p195, %p196
      %p198 = scmp.ne.s32.totalorder %s186, %s187
      %p199 = scmp.eq.s32.totalorder %s31, 1
      %p200 = por %p198, %p199
      %p202 = scmp.ne.s32.totalorder %s187, %s201
      %p203 = scmp.eq.s32.totalorder %s31, 0
      %p204 = por %p202, %p203
      %s206 = sadd.s32 %s205, 1
      %p209 = scmp.eq.s32.totalorder %s25, 1
      %p210 = scmp.ne.s32.totalorder %s205, %s207
      %p211 = scmp.eq.s32.totalorder %s25, 0
      %p212 = por %p210, %p211
      %p213 = scmp.ne.s32.totalorder %s205, %s207
      %p214 = scmp.eq.s32.totalorder %s30, 1
      %p215 = por %p213, %p214
      %p216 = scmp.ne.s32.totalorder %s207, %s208
      %p217 = scmp.eq.s32.totalorder %s30, 0
      %p218 = por %p216, %p217
      %p219 = scmp.ne.s32.totalorder %s207, %s208
      %p220 = scmp.eq.s32.totalorder %s31, 1
      %p221 = por %p219, %p220
      %p223 = scmp.ne.s32.totalorder %s208, %s222
      %p224 = scmp.eq.s32.totalorder %s31, 0
      %p225 = por %p223, %p224
      %s227 = sadd.s32 %s226, 1
      %p230 = scmp.eq.s32.totalorder %s25, 1
      %p231 = scmp.ne.s32.totalorder %s226, %s228
      %p232 = scmp.eq.s32.totalorder %s25, 0
      %p233 = por %p231, %p232
      %p234 = scmp.ne.s32.totalorder %s226, %s228
      %p235 = scmp.eq.s32.totalorder %s30, 1
      %p236 = por %p234, %p235
      %p237 = scmp.ne.s32.totalorder %s228, %s229
      %p238 = scmp.eq.s32.totalorder %s30, 0
      %p239 = por %p237, %p238
      %p240 = scmp.ne.s32.totalorder %s228, %s229
      %p241 = scmp.eq.s32.totalorder %s31, 1
      %p242 = por %p240, %p241
      %p244 = scmp.ne.s32.totalorder %s229, %s243
      %p245 = scmp.eq.s32.totalorder %s31, 0
      %p246 = por %p244, %p245
      %s248 = sadd.s32 %s247, 1
      %p251 = scmp.eq.s32.totalorder %s25, 1
      %p252 = scmp.ne.s32.totalorder %s247, %s249
      %p253 = scmp.eq.s32.totalorder %s25, 0
      %p254 = por %p252, %p253
      %p255 = scmp.ne.s32.totalorder %s247, %s249
      %p256 = scmp.eq.s32.totalorder %s30, 1
      %p257 = por %p255, %p256
      %p258 = scmp.ne.s32.totalorder %s249, %s250
      %p259 = scmp.eq.s32.totalorder %s30, 0
      %p260 = por %p258, %p259
      %p261 = scmp.ne.s32.totalorder %s249, %s250
      %p262 = scmp.eq.s32.totalorder %s31, 1
      %p263 = por %p261, %p262
      %p265 = scmp.ne.s32.totalorder %s250, %s264
      %p266 = scmp.eq.s32.totalorder %s31, 0
      %p267 = por %p265, %p266
      %s269 = sadd.s32 %s268, 1
      %p272 = scmp.eq.s32.totalorder %s25, 1
      %p273 = scmp.ne.s32.totalorder %s268, %s270
      %p274 = scmp.eq.s32.totalorder %s25, 0
      %p275 = por %p273, %p274
      %p276 = scmp.ne.s32.totalorder %s268, %s270
      %p277 = scmp.eq.s32.totalorder %s30, 1
      %p278 = por %p276, %p277
      %p279 = scmp.ne.s32.totalorder %s270, %s271
      %p280 = scmp.eq.s32.totalorder %s30, 0
      %p281 = por %p279, %p280
      %p282 = scmp.ne.s32.totalorder %s270, %s271
      %p283 = scmp.eq.s32.totalorder %s31, 1
      %p284 = por %p282, %p283
      %p286 = scmp.ne.s32.totalorder %s271, %s285
      %p287 = scmp.eq.s32.totalorder %s31, 0
      %p288 = por %p286, %p287
      %s290 = sadd.s32 %s289, 1
      %p293 = scmp.eq.s32.totalorder %s25, 1
      %p294 = scmp.ne.s32.totalorder %s289, %s291
      %p295 = scmp.eq.s32.totalorder %s25, 0
      %p296 = por %p294, %p295
      %p297 = scmp.ne.s32.totalorder %s289, %s291
      %p298 = scmp.eq.s32.totalorder %s30, 1
      %p299 = por %p297, %p298
      %p300 = scmp.ne.s32.totalorder %s291, %s292
      %p301 = scmp.eq.s32.totalorder %s30, 0
      %p302 = por %p300, %p301
      %p303 = scmp.ne.s32.totalorder %s291, %s292
      %p304 = scmp.eq.s32.totalorder %s31, 1
      %p305 = por %p303, %p304
      %p307 = scmp.ne.s32.totalorder %s292, %s306
      %p308 = scmp.eq.s32.totalorder %s31, 0
      %p309 = por %p307, %p308
      %s311 = sadd.s32 %s310, 1
      %p314 = scmp.eq.s32.totalorder %s25, 1
      %p315 = scmp.ne.s32.totalorder %s310, %s312
      %p316 = scmp.eq.s32.totalorder %s25, 0
      %p317 = por %p315, %p316
      %p318 = scmp.ne.s32.totalorder %s310, %s312
      %p319 = scmp.eq.s32.totalorder %s30, 1
      %p320 = por %p318, %p319
      %p321 = scmp.ne.s32.totalorder %s312, %s313
      %p322 = scmp.eq.s32.totalorder %s30, 0
      %p323 = por %p321, %p322
      %p324 = scmp.ne.s32.totalorder %s312, %s313
      %p325 = scmp.eq.s32.totalorder %s31, 1
      %p326 = por %p324, %p325
      %p328 = scmp.ne.s32.totalorder %s313, %s327
      %p329 = scmp.eq.s32.totalorder %s31, 0
      %p330 = por %p328, %p329
      %s332 = sadd.s32 %s331, 1
      %p335 = scmp.eq.s32.totalorder %s25, 1
      %p336 = scmp.ne.s32.totalorder %s331, %s333
      %p337 = scmp.eq.s32.totalorder %s25, 0
      %p338 = por %p336, %p337
      %p339 = scmp.ne.s32.totalorder %s331, %s333
      %p340 = scmp.eq.s32.totalorder %s30, 1
      %p341 = por %p339, %p340
      %p342 = scmp.ne.s32.totalorder %s333, %s334
      %p343 = scmp.eq.s32.totalorder %s30, 0
      %p344 = por %p342, %p343
      %p345 = scmp.ne.s32.totalorder %s333, %s334
      %p346 = scmp.eq.s32.totalorder %s31, 1
      %p347 = por %p345, %p346
      %p349 = scmp.ne.s32.totalorder %s334, %s348
      %p350 = scmp.eq.s32.totalorder %s31, 0
      %p351 = por %p349, %p350
      %s353 = sadd.s32 %s352, 1
      %p356 = scmp.eq.s32.totalorder %s25, 1
      %p357 = scmp.ne.s32.totalorder %s352, %s354
      %p358 = scmp.eq.s32.totalorder %s25, 0
      %p359 = por %p357, %p358
      %p360 = scmp.ne.s32.totalorder %s352, %s354
      %p361 = scmp.eq.s32.totalorder %s30, 1
      %p362 = por %p360, %p361
      %p363 = scmp.ne.s32.totalorder %s354, %s355
      %p364 = scmp.eq.s32.totalorder %s30, 0
      %p365 = por %p363, %p364
      %p366 = scmp.ne.s32.totalorder %s354, %s355
      %p367 = scmp.eq.s32.totalorder %s31, 1
      %p368 = por %p366, %p367
      %p370 = scmp.ne.s32.totalorder %s355, %s369
      %p371 = scmp.eq.s32.totalorder %s31, 0
      %p372 = por %p370, %p371
      %s374 = sadd.s32 %s373, 1
      %p377 = scmp.eq.s32.totalorder %s25, 1
      %p378 = scmp.ne.s32.totalorder %s373, %s375
      %p379 = scmp.eq.s32.totalorder %s25, 0
      %p380 = por %p378, %p379
      %p381 = scmp.ne.s32.totalorder %s373, %s375
      %p382 = scmp.eq.s32.totalorder %s30, 1
      %p383 = por %p381, %p382
      %p384 = scmp.ne.s32.totalorder %s375, %s376
      %p385 = scmp.eq.s32.totalorder %s30, 0
      %p386 = por %p384, %p385
      %p387 = scmp.ne.s32.totalorder %s375, %s376
      %p388 = scmp.eq.s32.totalorder %s31, 1
      %p389 = por %p387, %p388
      %p391 = scmp.ne.s32.totalorder %s376, %s390
      %p392 = scmp.eq.s32.totalorder %s31, 0
      %p393 = por %p391, %p392
      %s394 = ssub.s32 %s25, %s32
      %p395 = scmp.eq.s32.totalorder %s394, 0
      %s397 = sadd.s32 %s396, 1
      %s398 = scalar_select %p395, %s396, %s397
      %p401 = pneg %p395
      %p402 = scmp.eq.s32.totalorder %s25, 1
      %p403 = por %p401, %p402
      %p404 = scmp.ne.s32.totalorder %s396, %s399
      %p405 = scmp.eq.s32.totalorder %s25, 0
      %p406 = por %p404, %p405
      %p407 = scmp.ne.s32.totalorder %s396, %s399
      %p408 = scmp.eq.s32.totalorder %s30, 1
      %p409 = por %p407, %p408
      %p410 = scmp.ne.s32.totalorder %s399, %s400
      %p411 = scmp.eq.s32.totalorder %s30, 0
      %p412 = por %p410, %p411
      %p413 = scmp.ne.s32.totalorder %s399, %s400
      %p414 = scmp.eq.s32.totalorder %s31, 1
      %p415 = por %p413, %p414
      %p417 = scmp.ne.s32.totalorder %s400, %s416
      %p418 = scmp.eq.s32.totalorder %s31, 0
      %p419 = por %p417, %p418
      %p420 = scmp.le.s32.totalorder 1, %s25
      %p421 = scmp.lt.s32.totalorder %s25, 3
      %p422 = pnand %p420, %p421
      %p423 = pneg %p422
      // Predicated region
      $region9: #{tpu_custom_call.1} parent=5 // pred_check
        _
      $region10: #{tpu_custom_call.1} parent=5 // pred_check_branch
        %425 = sbr.rel (%p422) target = $region12
      $region11: #{tpu_custom_call.1} parent=5 // pred_region
        %s426 = ssub.s32 %s25, 1
        // Predicated region
        $region13: #{tpu_custom_call.1} parent=11 // pred_check
          %p427 = pneg %p176
        $region14: #{tpu_custom_call.1} parent=11 // pred_check_branch
          %429 = sbr.rel (%p427) target = $region16
        $region15: #{tpu_custom_call.1} parent=11 // pred_region
          _
        $region16: #{tpu_custom_call.1} parent=11 // pred_fallthru
          _
        // Predicated region
        $region17: #{tpu_custom_call.1} parent=11 // pred_check
          %p430 = pneg %p197
        $region18: #{tpu_custom_call.1} parent=11 // pred_check_branch
          %432 = sbr.rel (%p430) target = $region20
        $region19: #{tpu_custom_call.1} parent=11 // pred_region
          _
        $region20: #{tpu_custom_call.1} parent=11 // pred_fallthru
          _
        // Predicated region
        $region21: #{tpu_custom_call.1} parent=11 // pred_check
          %p433 = pneg %p218
        $region22: #{tpu_custom_call.1} parent=11 // pred_check_branch
          %435 = sbr.rel (%p433) target = $region24
        $region23: #{tpu_custom_call.1} parent=11 // pred_region
          _
        $region24: #{tpu_custom_call.1} parent=11 // pred_fallthru
          _
        // Predicated region
        $region25: #{tpu_custom_call.1} parent=11 // pred_check
          %p436 = pneg %p239
        $region26: #{tpu_custom_call.1} parent=11 // pred_check_branch
          %438 = sbr.rel (%p436) target = $region28
        $region27: #{tpu_custom_call.1} parent=11 // pred_region
          _
        $region28: #{tpu_custom_call.1} parent=11 // pred_fallthru
          _
        // Predicated region
        $region29: #{tpu_custom_call.1} parent=11 // pred_check
          %p439 = pneg %p260
        $region30: #{tpu_custom_call.1} parent=11 // pred_check_branch
          %441 = sbr.rel (%p439) target = $region32
        $region31: #{tpu_custom_call.1} parent=11 // pred_region
          _
        $region32: #{tpu_custom_call.1} parent=11 // pred_fallthru
          _
        // Predicated region
        $region33: #{tpu_custom_call.1} parent=11 // pred_check
          %p442 = pneg %p281
        $region34: #{tpu_custom_call.1} parent=11 // pred_check_branch
          %444 = sbr.rel (%p442) target = $region36
        $region35: #{tpu_custom_call.1} parent=11 // pred_region
          _
        $region36: #{tpu_custom_call.1} parent=11 // pred_fallthru
          _
        // Predicated region
        $region37: #{tpu_custom_call.1} parent=11 // pred_check
          %p445 = pneg %p302
        $region38: #{tpu_custom_call.1} parent=11 // pred_check_branch
          %447 = sbr.rel (%p445) target = $region40
        $region39: #{tpu_custom_call.1} parent=11 // pred_region
          _
        $region40: #{tpu_custom_call.1} parent=11 // pred_fallthru
          _
        // Predicated region
        $region41: #{tpu_custom_call.1} parent=11 // pred_check
          %p448 = pneg %p323
        $region42: #{tpu_custom_call.1} parent=11 // pred_check_branch
          %450 = sbr.rel (%p448) target = $region44
        $region43: #{tpu_custom_call.1} parent=11 // pred_region
          _
        $region44: #{tpu_custom_call.1} parent=11 // pred_fallthru
          _
        // Predicated region
        $region45: #{tpu_custom_call.1} parent=11 // pred_check
          %p451 = pneg %p344
        $region46: #{tpu_custom_call.1} parent=11 // pred_check_branch
          %453 = sbr.rel (%p451) target = $region48
        $region47: #{tpu_custom_call.1} parent=11 // pred_region
          _
        $region48: #{tpu_custom_call.1} parent=11 // pred_fallthru
          _
        // Predicated region
        $region49: #{tpu_custom_call.1} parent=11 // pred_check
          %p454 = pneg %p365
        $region50: #{tpu_custom_call.1} parent=11 // pred_check_branch
          %456 = sbr.rel (%p454) target = $region52
        $region51: #{tpu_custom_call.1} parent=11 // pred_region
          _
        $region52: #{tpu_custom_call.1} parent=11 // pred_fallthru
          _
        // Predicated region
        $region53: #{tpu_custom_call.1} parent=11 // pred_check
          %p457 = pneg %p386
        $region54: #{tpu_custom_call.1} parent=11 // pred_check_branch
          %459 = sbr.rel (%p457) target = $region56
        $region55: #{tpu_custom_call.1} parent=11 // pred_region
          _
        $region56: #{tpu_custom_call.1} parent=11 // pred_fallthru
          _
      $region12: #{tpu_custom_call.1} parent=5 // pred_fallthru
        _
      %p460 = scmp.lt.s32.totalorder %s25, 2
      // Predicated region
      $region57: #{tpu_custom_call.1} parent=5 // pred_check
        %p461 = pneg %p460
      $region58: #{tpu_custom_call.1} parent=5 // pred_check_branch
        %463 = sbr.rel (%p461) target = $region60
      $region59: #{tpu_custom_call.1} parent=5 // pred_region
        // Predicated region
        $region61: #{tpu_custom_call.1} parent=59 // pred_check
          %p464 = pneg %p45
        $region62: #{tpu_custom_call.1} parent=59 // pred_check_branch
          %466 = sbr.rel (%p464) target = $region64
        $region63: #{tpu_custom_call.1} parent=59 // pred_region
          %p467 = scmp.lt.s32.totalorder %s25, 1
          %s468 = scalar_select %p467, %s25, 1
          %s469 = smul.addr %s468, 8
          %s470 = scalar_lea.vmem %s0, %s469
        $region64: #{tpu_custom_call.1} parent=59 // pred_fallthru
          _
        // Predicated region
        $region65: #{tpu_custom_call.1} parent=59 // pred_check
          %p471 = pneg %p71
        $region66: #{tpu_custom_call.1} parent=59 // pred_check_branch
          %473 = sbr.rel (%p471) target = $region68
        $region67: #{tpu_custom_call.1} parent=59 // pred_region
          %p474 = scmp.lt.s32.totalorder %s25, 1
          %s475 = scalar_select %p474, %s25, 1
          %s476 = smul.addr %s475, 2
          %s477 = smul.addr %s476, 8
          %s478 = scalar_lea.vmem %s1, %s477
        $region68: #{tpu_custom_call.1} parent=59 // pred_fallthru
          _
        // Predicated region
        $region69: #{tpu_custom_call.1} parent=59 // pred_check
          %p479 = pneg %p97
        $region70: #{tpu_custom_call.1} parent=59 // pred_check_branch
          %481 = sbr.rel (%p479) target = $region72
        $region71: #{tpu_custom_call.1} parent=59 // pred_region
          %p482 = scmp.lt.s32.totalorder %s25, 1
          %s483 = scalar_select %p482, %s25, 1
          %s484 = smul.addr %s483, 2
          %s485 = smul.addr %s484, 4
          %s486 = scalar_lea.vmem %s2, %s485
        $region72: #{tpu_custom_call.1} parent=59 // pred_fallthru
          _
        // Predicated region
        $region73: #{tpu_custom_call.1} parent=59 // pred_check
          %p487 = pneg %p123
        $region74: #{tpu_custom_call.1} parent=59 // pred_check_branch
          %489 = sbr.rel (%p487) target = $region76
        $region75: #{tpu_custom_call.1} parent=59 // pred_region
          %p490 = scmp.lt.s32.totalorder %s25, 1
          %s491 = scalar_select %p490, %s25, 1
          %s492 = smul.addr %s491, 4
          %s493 = scalar_lea.vmem %s3, %s492
        $region76: #{tpu_custom_call.1} parent=59 // pred_fallthru
          _
        // Predicated region
        $region77: #{tpu_custom_call.1} parent=59 // pred_check
          %p494 = pneg %p149
        $region78: #{tpu_custom_call.1} parent=59 // pred_check_branch
          %496 = sbr.rel (%p494) target = $region80
        $region79: #{tpu_custom_call.1} parent=59 // pred_region
          %p497 = scmp.lt.s32.totalorder %s25, 1
          %s498 = scalar_select %p497, %s25, 1
          %s499 = scalar_lea.vmem %s4, %s498
        $region80: #{tpu_custom_call.1} parent=59 // pred_fallthru
          _
      $region60: #{tpu_custom_call.1} parent=5 // pred_fallthru
        _
      %p500 = scmp.le.s32.totalorder 1, %s25
      %p501 = scmp.lt.s32.totalorder %s25, 3
      %p502 = pnand %p500, %p501
      %p503 = pneg %p502
      // Predicated region
      $region81: #{tpu_custom_call.1} parent=5 // pred_check
        _
      $region82: #{tpu_custom_call.1} parent=5 // pred_check_branch
        %505 = sbr.rel (%p502) target = $region84
      $region83: #{tpu_custom_call.1} parent=5 // pred_region
        %s506 = ssub.s32 %s25, 1
        %p507 = scmp.lt.s32.totalorder %s30, 1
        %s508 = scalar_select %p507, %s30, 1
        %s509 = smul.addr %s508, 8
        %s510 = scalar_lea.vmem %s0, %s509
        %p511 = pneg %p51
        %p512 = pneg %p48
        %p513 = scmp.lt.s32.totalorder %s30, 1
        %s514 = scalar_select %p513, %s30, 1
        %s515 = smul.addr %s514, 2
        %s516 = smul.addr %s515, 8
        %s517 = scalar_lea.vmem %s1, %s516
        %p518 = pneg %p77
        %p519 = pneg %p74
        %p520 = scmp.lt.s32.totalorder %s30, 1
        %s521 = scalar_select %p520, %s30, 1
        %s522 = smul.addr %s521, 2
        %s523 = smul.addr %s522, 4
        %s524 = scalar_lea.vmem %s2, %s523
        %p525 = pneg %p103
        %p526 = pneg %p100
        %p527 = scmp.lt.s32.totalorder %s30, 1
        %s528 = scalar_select %p527, %s30, 1
        %s529 = smul.addr %s528, 4
        %s530 = scalar_lea.vmem %s3, %s529
        %p531 = pneg %p129
        %p532 = pneg %p126
        %p533 = scmp.lt.s32.totalorder %s30, 1
        %s534 = scalar_select %p533, %s30, 1
        %s535 = scalar_lea.vmem %s4, %s534
        %p536 = pneg %p155
        %p537 = pneg %p152
        %p538 = pneg %p176
        %p539 = pneg %p173
        %p540 = pneg %p197
        %p541 = pneg %p194
        %p542 = pneg %p218
        %p543 = pneg %p215
        %p544 = pneg %p239
        %p545 = pneg %p236
        %p546 = pneg %p260
        %p547 = pneg %p257
        %p548 = pneg %p281
        %p549 = pneg %p278
        %p550 = pneg %p302
        %p551 = pneg %p299
        %p552 = pneg %p323
        %p553 = pneg %p320
        %p554 = pneg %p344
        %p555 = pneg %p341
        %p556 = pneg %p365
        %p557 = pneg %p362
        %p558 = pneg %p386
        %p559 = pneg %p383
        %p560 = pneg %p412
        %p561 = pneg %p409
        %s562 = sand.u32 %s399, 1
        %s563 = scalar_lea.sflag [#allocation3], %s562
        %s564 = sand.u32 %s399, 1
        %s565 = scalar_lea.vmem [#allocation2], %s564
        %p566 = scmp.lt.s32.totalorder %s30, 1
        %s567 = scalar_select %p566, %s30, 1
        %s568 = smul.addr %s567, 8
        %s569 = scalar_lea.vmem %s0, %s568
        %p570 = scmp.lt.s32.totalorder %s30, 1
        %s571 = scalar_select %p570, %s30, 1
        %s572 = smul.addr %s571, 2
        %s573 = smul.addr %s572, 8
        %s574 = scalar_lea.vmem %s1, %s573
        %p575 = scmp.lt.s32.totalorder %s30, 1
        %s576 = scalar_select %p575, %s30, 1
        %s577 = smul.addr %s576, 2
        %s578 = smul.addr %s577, 4
        %s579 = scalar_lea.vmem %s2, %s578
        %p580 = scmp.lt.s32.totalorder %s30, 1
        %s581 = scalar_select %p580, %s30, 1
        %s582 = smul.addr %s581, 4
        %s583 = scalar_lea.vmem %s3, %s582
        %p584 = scmp.lt.s32.totalorder %s30, 1
        %s585 = scalar_select %p584, %s30, 1
        %s586 = scalar_lea.vmem %s4, %s585
        %v588 = vld [vmem:[%s569] sm:$0xff]
        %v589 = vld [vmem:[%s574] sm:$0xff]
        %v590 = vld [vmem:[%s574 + $0x8] sm:$0xff]
        %v591 = vld [vmem:[%s579] sm:$0xf]
        %v592 = vld [vmem:[%s579 + $0x4] sm:$0xf]
        %v593 = vld [vmem:[%s583] sm:$0xf]
        %v594 = vld [vmem:[%s586] sm:$0x1]
        %v595 = vld [vmem:[%s5] sm:$0xff]
        %v596 = vld [vmem:[%s5 + $0x8] sm:$0xff]
        %v597 = vld [vmem:[%s6] sm:$0xf]
        %v598 = vld [vmem:[%s6 + $0x4] sm:$0xf]
        %v599 = vld [vmem:[%s6 + $0x8] sm:$0xf]
        %v600 = vld [vmem:[%s6 + $0xc] sm:$0xf]
        %v601 = vld [vmem:[%s6 + $0x10] sm:$0xf]
        %v602 = vld [vmem:[%s6 + $0x14] sm:$0xf]
        %v603 = vld [vmem:[%s6 + $0x18] sm:$0xf]
        %v604 = vld [vmem:[%s6 + $0x1c] sm:$0xf]
        %v605 = vld [vmem:[%s6 + $0x20] sm:$0xf]
        %v606 = vld [vmem:[%s6 + $0x24] sm:$0xf]
        %v607 = vld [vmem:[%s6 + $0x28] sm:$0xf]
        %v608 = vld [vmem:[%s6 + $0x2c] sm:$0xf]
        %v609 = vld [vmem:[%s6 + $0x30] sm:$0xf]
        %v610 = vld [vmem:[%s6 + $0x34] sm:$0xf]
        %v611 = vld [vmem:[%s6 + $0x38] sm:$0xf]
        %v612 = vld [vmem:[%s6 + $0x3c] sm:$0xf]
        %v613 = vld [vmem:[%s6 + $0x40] sm:$0xf]
        %v614 = vld [vmem:[%s6 + $0x44] sm:$0xf]
        %v615 = vld [vmem:[%s6 + $0x48] sm:$0xf]
        %v616 = vld [vmem:[%s6 + $0x4c] sm:$0xf]
        %v617 = vld [vmem:[%s6 + $0x50] sm:$0xf]
        %v618 = vld [vmem:[%s6 + $0x54] sm:$0xf]
        %v619 = vld [vmem:[%s6 + $0x58] sm:$0xf]
        %v620 = vld [vmem:[%s6 + $0x5c] sm:$0xf]
        %v621 = vld [vmem:[%s6 + $0x60] sm:$0xf]
        %v622 = vld [vmem:[%s6 + $0x64] sm:$0xf]
        %v623 = vld [vmem:[%s6 + $0x68] sm:$0xf]
        %v624 = vld [vmem:[%s6 + $0x6c] sm:$0xf]
        %v625 = vld [vmem:[%s6 + $0x70] sm:$0xf]
        %v626 = vld [vmem:[%s6 + $0x74] sm:$0xf]
        %v627 = vld [vmem:[%s6 + $0x78] sm:$0xf]
        %v628 = vld [vmem:[%s6 + $0x7c] sm:$0xf]
        %v629 = vld [vmem:[%s7] sm:$0xff]
        %v630 = vld [vmem:[%s8] sm:$0x1]
        %v632 = vperm.slane %v630, 0
        %vm634 = vcmask 64512
        %v636 = vsel %vm634, %v588, 0
        %638 = vmatpush.msra.mxu0 0.0
        %639 = vmatpush.msra.mxu0 0.0
        %640 = vmatpush.msra.mxu0 0.0
        %641 = vmatpush.msra.mxu0 0.0
        %642 = vmatpush.msra.mxu0 0.0
        %643 = vmatpush.msra.mxu0 0.0
        %644 = vmatpush.msra.mxu0 0.0
        %645 = vmatpush.msra.mxu0 0.0
        %646 = vmatpush.msra.mxu0 0.0
        %647 = vmatpush.msra.mxu0 0.0
        %648 = vmatpush.msra.mxu0 0.0
        %649 = vmatpush.msra.mxu0 0.0
        %650 = vmatpush.msra.mxu0 0.0
        %651 = vmatpush.msra.mxu0 0.0
        %652 = vmatpush.msra.mxu0 0.0
        %653 = vmatpush.msra.mxu0 %v629
        %654 = vmatmul.f32.gmra.mxu0 %v636
        %v655 = vpop.f32.mrf.mxu0
        %v656 = vadd.f32 %v632, %v655
        %657 = vdwg.mxu0
        %v658 = vmax.f32 %v656, 0.0
        %v659 = vld [vmem:[%s9] sm:$0xff]
        %v660 = vld [vmem:[%s9 + $0x8] sm:$0xf]
        %v661 = vld [vmem:[%s10] sm:$0x1]
        %v663 = vperm.slane %v661, 0
        %vm665 = vcmask 97280
        %v667 = vsel %vm665, %v589, 0
        %v670 = vsel %vm665, %v590, 0
        %vm672 = vcmask 1043456
        %v674 = vsel %vm672, %v660, 0
        %676 = vmatpush.msra.mxu0 0.0
        %677 = vmatpush.msra.mxu0 0.0
        %678 = vmatpush.msra.mxu0 0.0
        %679 = vmatpush.msra.mxu0 0.0
        %680 = vmatpush.msra.mxu0 0.0
        %681 = vmatpush.msra.mxu0 0.0
        %682 = vmatpush.msra.mxu0 0.0
        %683 = vmatpush.msra.mxu0 0.0
        %684 = vmatpush.msra.mxu0 0.0
        %685 = vmatpush.msra.mxu0 0.0
        %686 = vmatpush.msra.mxu0 0.0
        %687 = vmatpush.msra.mxu0 0.0
        %688 = vmatpush.msra.mxu0 0.0
        %689 = vmatpush.msra.mxu0 0.0
        %690 = vmatpush.msra.mxu0 %v674
        %691 = vmatpush.msra.mxu0 %v659
        %692 = vmatmul.f32.gmra.mxu0 %v667
        %v693 = vpop.f32.mrf.mxu0
        %v694 = vadd.f32 %v663, %v693
        %695 = vmatmul.f32.gmra.mxu0 %v670
        %v696 = vpop.f32.mrf.mxu0
        %v697 = vadd.f32 %v663, %v696
        %698 = vdwg.mxu0
        %v699 = vmax.f32 %v694, 0.0
        %v700 = vmax.f32 %v697, 0.0
        %v701 = vld [vmem:[%s11] sm:$0xff]
        %v702 = vld [vmem:[%s11 + $0x8] sm:$0xff]
        %v703 = vld [vmem:[%s11 + $0x10] sm:$0xff]
        %v704 = vld [vmem:[%s11 + $0x18] sm:$0xff]
        %v705 = vld [vmem:[%s11 + $0x20] sm:$0xff]
        %v706 = vld [vmem:[%s11 + $0x28] sm:$0xff]
        %v707 = vld [vmem:[%s11 + $0x30] sm:$0xff]
        %v708 = vld [vmem:[%s11 + $0x38] sm:$0xff]
        %v709 = vld [vmem:[%s12] sm:$0x3]
        %v711 = vperm.slane %v709, 0
        %v712 = vperm.slane %v709, 1
        %vm715 = vcmask 261120
        %v717 = vsel %vm715, %v699, 0
        %v720 = vsel %vm715, %v700, 0
        %722 = vmatpush.msra.mxu0 0.0
        %723 = vmatpush.msra.mxu0 0.0
        %724 = vmatpush.msra.mxu0 0.0
        %725 = vmatpush.msra.mxu0 0.0
        %726 = vmatpush.msra.mxu0 0.0
        %727 = vmatpush.msra.mxu0 0.0
        %728 = vmatpush.msra.mxu0 0.0
        %729 = vmatpush.msra.mxu0 0.0
        %730 = vmatpush.msra.mxu0 0.0
        %731 = vmatpush.msra.mxu0 0.0
        %732 = vmatpush.msra.mxu0 0.0
        %733 = vmatpush.msra.mxu0 0.0
        %734 = vmatpush.msra.mxu0 %v707
        %735 = vmatpush.msra.mxu0 %v705
        %736 = vmatpush.msra.mxu0 %v703
        %737 = vmatpush.msra.mxu0 %v701
        %738 = vmatmul.f32.gmra.mxu0 %v717
        %v739 = vpop.f32.mrf.mxu0
        %v740 = vadd.f32 %v711, %v739
        %741 = vmatmul.f32.gmra.mxu0 %v720
        %v742 = vpop.f32.mrf.mxu0
        %v743 = vadd.f32 %v711, %v742
        %744 = vdwg.mxu0
        %745 = vmatpush.msra.mxu0 0.0
        %746 = vmatpush.msra.mxu0 0.0
        %747 = vmatpush.msra.mxu0 0.0
        %748 = vmatpush.msra.mxu0 0.0
        %749 = vmatpush.msra.mxu0 0.0
        %750 = vmatpush.msra.mxu0 0.0
        %751 = vmatpush.msra.mxu0 0.0
        %752 = vmatpush.msra.mxu0 0.0
        %753 = vmatpush.msra.mxu0 0.0
        %754 = vmatpush.msra.mxu0 0.0
        %755 = vmatpush.msra.mxu0 0.0
        %756 = vmatpush.msra.mxu0 0.0
        %757 = vmatpush.msra.mxu0 %v708
        %758 = vmatpush.msra.mxu0 %v706
        %759 = vmatpush.msra.mxu0 %v704
        %760 = vmatpush.msra.mxu0 %v702
        %761 = vmatmul.f32.gmra.mxu0 %v717
        %v762 = vpop.f32.mrf.mxu0
        %v763 = vadd.f32 %v712, %v762
        %764 = vmatmul.f32.gmra.mxu0 %v720
        %v765 = vpop.f32.mrf.mxu0
        %v766 = vadd.f32 %v712, %v765
        %767 = vdwg.mxu0
        %v768 = vld [vmem:[%s13] sm:$0x1]
        %v770 = vperm.slane %v768, 0
        %v772 = vpack.c.bf16 %v658, %v658
        %v775 = vunpack.c.l.b16 %v591
        %v776 = vunpack.c.l.b16 %v592
        %v777 = vpack.c.b16 %v776, %v775
        %v779 = vsel %vm634, %v777, 0
        %v782 = vsel %vm672, %v772, 0
        %784 = vmatpush.bf16.msra.mxu0 0
        %785 = vmatpush.bf16.msra.mxu0 0
        %786 = vmatpush.bf16.msra.mxu0 0
        %787 = vmatpush.bf16.msra.mxu0 0
        %788 = vmatpush.bf16.msra.mxu0 0
        %789 = vmatpush.bf16.msra.mxu0 0
        %790 = vmatpush.bf16.msra.mxu0 0
        %791 = vmatpush.bf16.msra.mxu0 %v782
        %792 = vmatmul.bf16.gmra.mxu0 %v779
        %v793 = vpop.f32.mrf.mxu0
        %v794 = vadd.f32 0.0, %v793
        %v795 = vpop.f32.mrf.mxu0
        %v796 = vadd.f32 0.0, %v795
        %797 = vdwg.mxu0
        %v798 = vpack.c.bf16 %v796, %v794
        %v801 = vunpack.c.l.b16 %v595
        %v802 = vunpack.c.h.b16 %v595
        %v803 = vunpack.c.l.b16 %v596
        %v804 = vunpack.c.h.b16 %v596
        %v805 = vpack.c.b16 %v803, %v801
        %v806 = vpack.c.b16 %v804, %v802
        %vm809 = vcmask 130048
        %v811 = vsel %vm809, %v798, 0
        %813 = vmatpush.bf16.msra.mxu0 0
        %814 = vmatpush.bf16.msra.mxu0 0
        %815 = vmatpush.bf16.msra.mxu0 0
        %816 = vmatpush.bf16.msra.mxu0 0
        %817 = vmatpush.bf16.msra.mxu0 0
        %818 = vmatpush.bf16.msra.mxu0 0
        %819 = vmatpush.bf16.msra.mxu0 0
        %820 = vmatpush.bf16.msra.mxu0 %v805
        %821 = vmatmul.bf16.gmra.mxu0 %v811
        %v822 = vpop.f32.mrf.mxu0
        %v823 = vadd.f32 0.0, %v822
        %v824 = vpop.f32.mrf.mxu0
        %v825 = vadd.f32 0.0, %v824
        %826 = vdwg.mxu0
        %827 = vmatpush.bf16.msra.mxu0 0
        %828 = vmatpush.bf16.msra.mxu0 0
        %829 = vmatpush.bf16.msra.mxu0 0
        %830 = vmatpush.bf16.msra.mxu0 0
        %831 = vmatpush.bf16.msra.mxu0 0
        %832 = vmatpush.bf16.msra.mxu0 0
        %833 = vmatpush.bf16.msra.mxu0 0
        %834 = vmatpush.bf16.msra.mxu0 %v806
        %835 = vmatmul.bf16.gmra.mxu0 %v811
        %v836 = vpop.f32.mrf.mxu0
        %v837 = vadd.f32 0.0, %v836
        %v838 = vpop.f32.mrf.mxu0
        %v839 = vadd.f32 0.0, %v838
        %840 = vdwg.mxu0
        %v841 = vmul.f32 %v823, %v740
        %v842 = vmul.f32 %v837, %v763
        %v843 = vmul.f32 %v825, %v743
        %v844 = vmul.f32 %v839, %v766
        %v845 = vpack.c.bf16 %v843, %v841
        %v846 = vpack.c.bf16 %v844, %v842
        %v879 = vunpack.c.l.b16 %v597
        %v880 = vunpack.c.l.b16 %v598
        %v881 = vunpack.c.l.b16 %v599
        %v882 = vunpack.c.l.b16 %v600
        %v883 = vunpack.c.l.b16 %v601
        %v884 = vunpack.c.l.b16 %v602
        %v885 = vunpack.c.l.b16 %v603
        %v886 = vunpack.c.l.b16 %v604
        %v887 = vunpack.c.l.b16 %v605
        %v888 = vunpack.c.l.b16 %v606
        %v889 = vunpack.c.l.b16 %v607
        %v890 = vunpack.c.l.b16 %v608
        %v891 = vunpack.c.l.b16 %v609
        %v892 = vunpack.c.l.b16 %v610
        %v893 = vunpack.c.l.b16 %v611
        %v894 = vunpack.c.l.b16 %v612
        %v895 = vunpack.c.l.b16 %v613
        %v896 = vunpack.c.l.b16 %v614
        %v897 = vunpack.c.l.b16 %v615
        %v898 = vunpack.c.l.b16 %v616
        %v899 = vunpack.c.l.b16 %v617
        %v900 = vunpack.c.l.b16 %v618
        %v901 = vunpack.c.l.b16 %v619
        %v902 = vunpack.c.l.b16 %v620
        %v903 = vunpack.c.l.b16 %v621
        %v904 = vunpack.c.l.b16 %v622
        %v905 = vunpack.c.l.b16 %v623
        %v906 = vunpack.c.l.b16 %v624
        %v907 = vunpack.c.l.b16 %v625
        %v908 = vunpack.c.l.b16 %v626
        %v909 = vunpack.c.l.b16 %v627
        %v910 = vunpack.c.l.b16 %v628
        %v911 = vpack.c.b16 %v880, %v879
        %v912 = vpack.c.b16 %v882, %v881
        %v913 = vpack.c.b16 %v884, %v883
        %v914 = vpack.c.b16 %v886, %v885
        %v915 = vpack.c.b16 %v888, %v887
        %v916 = vpack.c.b16 %v890, %v889
        %v917 = vpack.c.b16 %v892, %v891
        %v918 = vpack.c.b16 %v894, %v893
        %v919 = vpack.c.b16 %v896, %v895
        %v920 = vpack.c.b16 %v898, %v897
        %v921 = vpack.c.b16 %v900, %v899
        %v922 = vpack.c.b16 %v902, %v901
        %v923 = vpack.c.b16 %v904, %v903
        %v924 = vpack.c.b16 %v906, %v905
        %v925 = vpack.c.b16 %v908, %v907
        %v926 = vpack.c.b16 %v910, %v909
        %943 = vmatpush.bf16.msra.mxu0 %v918
        %944 = vmatpush.bf16.msra.mxu0 %v917
        %945 = vmatpush.bf16.msra.mxu0 %v916
        %946 = vmatpush.bf16.msra.mxu0 %v915
        %947 = vmatpush.bf16.msra.mxu0 %v914
        %948 = vmatpush.bf16.msra.mxu0 %v913
        %949 = vmatpush.bf16.msra.mxu0 %v912
        %950 = vmatpush.bf16.msra.mxu0 %v911
        %951 = vmatmul.bf16.gmra.mxu0 %v845
        %v952 = vpop.f32.mrf.mxu0
        %v953 = vadd.f32 0.0, %v952
        %v954 = vpop.f32.mrf.mxu0
        %v955 = vadd.f32 0.0, %v954
        %956 = vdwg.mxu0
        %957 = vmatpush.bf16.msra.mxu0 %v926
        %958 = vmatpush.bf16.msra.mxu0 %v925
        %959 = vmatpush.bf16.msra.mxu0 %v924
        %960 = vmatpush.bf16.msra.mxu0 %v923
        %961 = vmatpush.bf16.msra.mxu0 %v922
        %962 = vmatpush.bf16.msra.mxu0 %v921
        %963 = vmatpush.bf16.msra.mxu0 %v920
        %964 = vmatpush.bf16.msra.mxu0 %v919
        %965 = vmatmul.bf16.gmra.mxu0 %v846
        %v966 = vpop.f32.mrf.mxu0
        %v967 = vadd.f32 %v953, %v966
        %v968 = vpop.f32.mrf.mxu0
        %v969 = vadd.f32 %v955, %v968
        %970 = vdwg.mxu0
        %v971 = vpack.c.bf16 %v969, %v967
        %v973 = vsel %vm809, %v593, 0
        %975 = vmatpush.bf16.msra.mxu0 0
        %976 = vmatpush.bf16.msra.mxu0 0
        %977 = vmatpush.bf16.msra.mxu0 0
        %978 = vmatpush.bf16.msra.mxu0 0
        %979 = vmatpush.bf16.msra.mxu0 0
        %980 = vmatpush.bf16.msra.mxu0 0
        %981 = vmatpush.bf16.msra.mxu0 0
        %982 = vmatpush.bf16.msra.mxu0 %v971
        %983 = vmatmul.bf16.gmra.mxu0 %v973
        %v984 = vpop.f32.mrf.mxu0
        %v985 = vadd.f32 %v770, %v984
        %v986 = vpop.f32.mrf.mxu0
        %987 = vdwg.mxu0
        %v988 = vmax.f32 %v985, 0.0
        %v989 = vpack.c.bf16 %v988, %v988
        %v991 = vsel %vm672, %v989, 0
        %993 = vmatpush.bf16.msra.mxu0 0
        %994 = vmatpush.bf16.msra.mxu0 0
        %995 = vmatpush.bf16.msra.mxu0 0
        %996 = vmatpush.bf16.msra.mxu0 0
        %997 = vmatpush.bf16.msra.mxu0 0
        %998 = vmatpush.bf16.msra.mxu0 0
        %999 = vmatpush.bf16.msra.mxu0 0
        %1000 = vmatpush.bf16.msra.mxu0 %v991
        %1001 = vmatmul.bf16.gmra.mxu0 %v779
        %v1002 = vpop.f32.mrf.mxu0
        %v1003 = vadd.f32 0.0, %v1002
        %v1004 = vpop.f32.mrf.mxu0
        %v1005 = vadd.f32 0.0, %v1004
        %1006 = vdwg.mxu0
        %v1007 = vpack.c.bf16 %v1005, %v1003
        %v1009 = vsel %vm809, %v1007, 0
        %1011 = vmatpush.bf16.msra.mxu0 0
        %1012 = vmatpush.bf16.msra.mxu0 0
        %1013 = vmatpush.bf16.msra.mxu0 0
        %1014 = vmatpush.bf16.msra.mxu0 0
        %1015 = vmatpush.bf16.msra.mxu0 0
        %1016 = vmatpush.bf16.msra.mxu0 0
        %1017 = vmatpush.bf16.msra.mxu0 0
        %1018 = vmatpush.bf16.msra.mxu0 %v805
        %1019 = vmatmul.bf16.gmra.mxu0 %v1009
        %v1020 = vpop.f32.mrf.mxu0
        %v1021 = vadd.f32 0.0, %v1020
        %v1022 = vpop.f32.mrf.mxu0
        %v1023 = vadd.f32 0.0, %v1022
        %1024 = vdwg.mxu0
        %1025 = vmatpush.bf16.msra.mxu0 0
        %1026 = vmatpush.bf16.msra.mxu0 0
        %1027 = vmatpush.bf16.msra.mxu0 0
        %1028 = vmatpush.bf16.msra.mxu0 0
        %1029 = vmatpush.bf16.msra.mxu0 0
        %1030 = vmatpush.bf16.msra.mxu0 0
        %1031 = vmatpush.bf16.msra.mxu0 0
        %1032 = vmatpush.bf16.msra.mxu0 %v806
        %1033 = vmatmul.bf16.gmra.mxu0 %v1009
        %v1034 = vpop.f32.mrf.mxu0
        %v1035 = vadd.f32 0.0, %v1034
        %v1036 = vpop.f32.mrf.mxu0
        %v1037 = vadd.f32 0.0, %v1036
        %1038 = vdwg.mxu0
        %v1039 = vmul.f32 %v1021, %v740
        %v1040 = vmul.f32 %v1035, %v763
        %v1041 = vmul.f32 %v1023, %v743
        %v1042 = vmul.f32 %v1037, %v766
        %v1043 = vpack.c.bf16 %v1041, %v1039
        %v1044 = vpack.c.bf16 %v1042, %v1040
        %1045 = vmatpush.bf16.msra.mxu0 %v918
        %1046 = vmatpush.bf16.msra.mxu0 %v917
        %1047 = vmatpush.bf16.msra.mxu0 %v916
        %1048 = vmatpush.bf16.msra.mxu0 %v915
        %1049 = vmatpush.bf16.msra.mxu0 %v914
        %1050 = vmatpush.bf16.msra.mxu0 %v913
        %1051 = vmatpush.bf16.msra.mxu0 %v912
        %1052 = vmatpush.bf16.msra.mxu0 %v911
        %1053 = vmatmul.bf16.gmra.mxu0 %v1043
        %v1054 = vpop.f32.mrf.mxu0
        %v1055 = vadd.f32 0.0, %v1054
        %v1056 = vpop.f32.mrf.mxu0
        %v1057 = vadd.f32 0.0, %v1056
        %1058 = vdwg.mxu0
        %1059 = vmatpush.bf16.msra.mxu0 %v926
        %1060 = vmatpush.bf16.msra.mxu0 %v925
        %1061 = vmatpush.bf16.msra.mxu0 %v924
        %1062 = vmatpush.bf16.msra.mxu0 %v923
        %1063 = vmatpush.bf16.msra.mxu0 %v922
        %1064 = vmatpush.bf16.msra.mxu0 %v921
        %1065 = vmatpush.bf16.msra.mxu0 %v920
        %1066 = vmatpush.bf16.msra.mxu0 %v919
        %1067 = vmatmul.bf16.gmra.mxu0 %v1044
        %v1068 = vpop.f32.mrf.mxu0
        %v1069 = vadd.f32 %v1055, %v1068
        %v1070 = vpop.f32.mrf.mxu0
        %v1071 = vadd.f32 %v1057, %v1070
        %1072 = vdwg.mxu0
        %v1073 = vpack.c.bf16 %v1071, %v1069
        %1074 = vmatpush.bf16.msra.mxu0 0
        %1075 = vmatpush.bf16.msra.mxu0 0
        %1076 = vmatpush.bf16.msra.mxu0 0
        %1077 = vmatpush.bf16.msra.mxu0 0
        %1078 = vmatpush.bf16.msra.mxu0 0
        %1079 = vmatpush.bf16.msra.mxu0 0
        %1080 = vmatpush.bf16.msra.mxu0 0
        %1081 = vmatpush.bf16.msra.mxu0 %v1073
        %1082 = vmatmul.bf16.gmra.mxu0 %v973
        %v1083 = vpop.f32.mrf.mxu0
        %v1084 = vadd.f32 %v770, %v1083
        %v1085 = vpop.f32.mrf.mxu0
        %1086 = vdwg.mxu0
        %v1087 = vmax.f32 %v1084, 0.0
        %v1089 = vsel %vm634, %v594, 0
        %1091 = vmatpush.msra.mxu0 0.0
        %1092 = vmatpush.msra.mxu0 0.0
        %1093 = vmatpush.msra.mxu0 0.0
        %1094 = vmatpush.msra.mxu0 0.0
        %1095 = vmatpush.msra.mxu0 0.0
        %1096 = vmatpush.msra.mxu0 0.0
        %1097 = vmatpush.msra.mxu0 0.0
        %1098 = vmatpush.msra.mxu0 0.0
        %1099 = vmatpush.msra.mxu0 0.0
        %1100 = vmatpush.msra.mxu0 0.0
        %1101 = vmatpush.msra.mxu0 0.0
        %1102 = vmatpush.msra.mxu0 0.0
        %1103 = vmatpush.msra.mxu0 0.0
        %1104 = vmatpush.msra.mxu0 0.0
        %1105 = vmatpush.msra.mxu0 0.0
        %1106 = vmatpush.msra.mxu0 %v1087
        %1107 = vmatmul.f32.gmra.mxu0 %v1089
        %v1108 = vpop.f32.mrf.mxu0
        %v1109 = vadd.f32 0.0, %v1108
        %1110 = vdwg.mxu0
        %v1111 = vld [vmem:[%s14] sm:$0xff]
        %v1112 = vld [vmem:[%s14 + $0x8] sm:$0xff]
        %v1113 = vld [vmem:[%s15] sm:$0x1]
        %v1115 = vsel %vm809, %v1109, 0
        %1117 = vmatpush.msra.mxu0 0.0
        %1118 = vmatpush.msra.mxu0 0.0
        %1119 = vmatpush.msra.mxu0 0.0
        %1120 = vmatpush.msra.mxu0 0.0
        %1121 = vmatpush.msra.mxu0 0.0
        %1122 = vmatpush.msra.mxu0 0.0
        %1123 = vmatpush.msra.mxu0 0.0
        %1124 = vmatpush.msra.mxu0 0.0
        %1125 = vmatpush.msra.mxu0 0.0
        %1126 = vmatpush.msra.mxu0 0.0
        %1127 = vmatpush.msra.mxu0 0.0
        %1128 = vmatpush.msra.mxu0 0.0
        %1129 = vmatpush.msra.mxu0 0.0
        %1130 = vmatpush.msra.mxu0 0.0
        %1131 = vmatpush.msra.mxu0 %v1112
        %1132 = vmatpush.msra.mxu0 %v1111
        %1133 = vmatmul.f32.gmra.mxu0 %v1115
        %v1134 = vpop.f32.mrf.mxu0
        %v1135 = vadd.f32 %v1113, %v1134
        %1136 = vdwg.mxu0
        %vm1137 = vcmask 8192
        %1138 = vst.msk [vmem:[%s565] sm:$0x1] %vm1137, %v1135
        %s1139 = sand.u32 %s399, 1
        %s1140 = scalar_lea.sflag [#allocation3], %s1139
        %s1141 = sand.u32 %s399, 1
        %s1142 = scalar_lea.vmem [#allocation2], %s1141
        // Predicated region
        $region85: #{tpu_custom_call.1} parent=83 // pred_check
          %p1143 = pneg %p409
        $region86: #{tpu_custom_call.1} parent=83 // pred_check_branch
          %1145 = sbr.rel (%p1143) target = $region88
        $region87: #{tpu_custom_call.1} parent=83 // pred_region
          %1147 = vsyncadd %s1140, 0
          %s1148 = scalar_lea.hbm %s16, %s30
          %s1150 = sshll.u32 %s1142, 4
          %s1151 = int_to_ptr.vmem [resolvable:$true] %s1150
          %s1152 = sshll.u32 %s1148, 4
          %s1153 = int_to_ptr.hbm [resolvable:$true] %s1152
          %1155 = dma.vmem_to_hbm [thread:$0]  %s1151, 16, %s1153, %s1140
        $region88: #{tpu_custom_call.1} parent=83 // pred_fallthru
          _
      $region84: #{tpu_custom_call.1} parent=5 // pred_fallthru
        _
      %p1156 = scmp.le.s32.totalorder 2, %s25
      // Predicated region
      $region89: #{tpu_custom_call.1} parent=5 // pred_check
        %p1157 = pneg %p1156
      $region90: #{tpu_custom_call.1} parent=5 // pred_check_branch
        %1159 = sbr.rel (%p1157) target = $region92
      $region91: #{tpu_custom_call.1} parent=5 // pred_region
        %s1160 = ssub.s32 %s25, 2
        // Predicated region
        $region93: #{tpu_custom_call.1} parent=91 // pred_check
          %p1161 = pneg %p415
        $region94: #{tpu_custom_call.1} parent=91 // pred_check_branch
          %1163 = sbr.rel (%p1161) target = $region96
        $region95: #{tpu_custom_call.1} parent=91 // pred_region
          %s1164 = sand.u32 %s400, 1
          %s1165 = scalar_lea.sflag [#allocation3], %s1164
          %s1166 = sand.u32 %s400, 1
          %s1167 = scalar_lea.vmem [#allocation2], %s1166
          %1169 = dma.done %s1165, 16
        $region96: #{tpu_custom_call.1} parent=91 // pred_fallthru
          _
      $region92: #{tpu_custom_call.1} parent=5 // pred_fallthru
        _
    $region6: #{tpu_custom_call.1} parent=1 // loop_footer
      %s29 = sadd.s32 1, %s25
    $region7: #{tpu_custom_call.1} parent=1 // loop_footer_branch
      %24 = sbr.rel target = $region3
    $region8: #{tpu_custom_call.1} parent=1 // loop_exit
      _
    %1170 = vsyncpa [#allocation3], 1
    %s1171 = scalar_lea.sflag [#allocation3], 1
    %1172 = vsyncpa %s1171, 1

</llo_original>
